<compile_context>
chip_gen: v5e
topology: v5e:2x2
jax: 0.10.0
libtpu: 0.0.40
codegen_flags: <defaults>
</compile_context>

<pallas_src>
import jax
import jax.numpy as jnp
from jax.experimental import pallas as pl
from jax.experimental.pallas import tpu as pltpu


def _round_up(a, b):
    return (a + b - 1) // b * b


def _cdiv(a, b):
    return (a + b - 1) // b


def spatial_aggregation_block(x, weight, bias, gamma, beta, *,
                              eps=1e-3, tile_t_max=2048):
    """Pallas implementation of SpatialAggregationBlock.forward (training mode).

    x:      (N, Cin, T, H, W) float32 (NCDHW)
    weight: (Cout, Cin, KT, KH, KW) with KH == H, KW == W
    bias:   (Cout,)  -- cancelled by training-mode BatchNorm (kept for API parity)
    gamma, beta: (Cout,) BatchNorm affine parameters
    returns: (N, Cout, T_out) float32, T_out = T - KT + 1
    """
    n, cin, t, h, w_sp = x.shape
    cout, cin_w, kt, kh, kw = weight.shape
    assert cin == cin_w and kh == h and kw == w_sp, \
        "spatial kernel must cover the full spatial extent"
    assert t >= kt
    t_out = t - kt + 1
    k = cin * h * w_sp
    ktk = kt * k

    # --- pass-1 time tiling (time lives on the 128-lane axis) ---------------
    tile_t = min(_round_up(tile_t_max, 128), _round_up(t_out, 128))

    def _pass1_vmem(tt):
        # double-buffered x block + conv block, live (Cout,tile_t) acc, weights, stats
        return 4 * (2 * ktk * tt + 3 * cout * tt + 2 * cout * ktk + 8 * cout)

    while tile_t > 128 and _pass1_vmem(tile_t) > 20 * 1024 * 1024:
        tile_t -= 128

    num_tiles = _cdiv(t_out, tile_t)
    # Keep at least 2 grid steps when possible so both v7x TensorCores get work.
    if n * num_tiles < 2 and t_out > 128:
        tile_t = _round_up(_cdiv(t_out, 2), 128)
        num_tiles = _cdiv(t_out, tile_t)
    t_pad = num_tiles * tile_t

    # --- wrapper-side layout: im2col with time on lanes ---------------------
    # x_col[n, dt*K + j, tau] = x[n, cin, tau+dt, kh, kw]  (j = flat (cin,kh,kw))
    x_flat = jnp.transpose(x, (0, 2, 1, 3, 4)).reshape(n, t, k)          # (N, T, K)
    x_col = jnp.concatenate([x_flat[:, dt:dt + t_out, :] for dt in range(kt)],
                            axis=2)                                       # (N, T_out, KT*K)
    x_col = jnp.transpose(x_col, (0, 2, 1))                               # (N, KT*K, T_out)
    # zero-pad time so padded columns give conv == 0 -> stats need no mask
    x_col = jnp.pad(x_col, ((0, 0), (0, 0), (0, t_pad - t_out)))

    # weight -> (Cout, KT*K) matching x_col's (dt, cin, kh, kw) flattening
    w_mat = jnp.transpose(weight, (0, 2, 1, 3, 4)).reshape(cout, ktk)

    cparams = pltpu.CompilerParams(
        dimension_semantics=("parallel", "parallel"),
        vmem_limit_bytes=32 * 1024 * 1024,
    )

    # ---------------- pass 1: single-matmul conv + per-tile partial stats ---
    def conv_stats_kernel(x_ref, w_ref, conv_ref, psum_ref, psq_ref):
        # (Cout, KT*K) @ (KT*K, tile_t) -> (Cout, tile_t), already lane-dense.
        acc = jnp.dot(w_ref[...], x_ref[0],
                      preferred_element_type=jnp.float32)
        conv_ref[0] = acc
        # padded time columns are exactly zero -> no validity mask needed
        psum_ref[0, 0] = jnp.sum(acc, axis=1, keepdims=True)          # (Cout, 1)
        psq_ref[0, 0] = jnp.sum(acc * acc, axis=1, keepdims=True)     # (Cout, 1)

    conv_out, psum, psq = pl.pallas_call(
        conv_stats_kernel,
        grid=(n, num_tiles),
        in_specs=[
            pl.BlockSpec((1, ktk, tile_t), lambda b, i: (b, 0, i)),
            pl.BlockSpec((cout, ktk), lambda b, i: (0, 0)),
        ],
        out_specs=(
            pl.BlockSpec((1, cout, tile_t), lambda b, i: (b, 0, i)),
            pl.BlockSpec((1, 1, cout, 1), lambda b, i: (b, i, 0, 0)),
            pl.BlockSpec((1, 1, cout, 1), lambda b, i: (b, i, 0, 0)),
        ),
        out_shape=(
            jax.ShapeDtypeStruct((n, cout, t_out), jnp.float32),   # ragged last block
            jax.ShapeDtypeStruct((n, num_tiles, cout, 1), jnp.float32),
            jax.ShapeDtypeStruct((n, num_tiles, cout, 1), jnp.float32),
        ),
        compiler_params=cparams,
        cost_estimate=pl.CostEstimate(
            flops=2 * n * t_pad * ktk * cout + 3 * n * t_pad * cout,
            transcendentals=0,
            bytes_accessed=4 * (n * ktk * t_pad + n * cout * t_out
                                + cout * ktk + 2 * n * num_tiles * cout)),
    )(x_col, w_mat)

    # ---------------- finalize global BN stats (tiny per-channel math) ------
    count = float(n * t_out)
    ch_sum = jnp.sum(psum, axis=(0, 1, 3))                     # (Cout,)
    ch_sq = jnp.sum(psq, axis=(0, 1, 3))                       # (Cout,)
    mean = ch_sum / count
    # TODO(synk): E[x^2]-mean^2 in f32 can cancel for extreme conv means; an
    # offset-corrected / combined two-pass variance would be more robust.
    var = jnp.maximum(ch_sq / count - mean * mean, 0.0)        # biased variance
    inv_std = jax.lax.rsqrt(var + eps)
    scale = (gamma * inv_std).reshape(1, cout, 1).astype(jnp.float32)
    shift = (beta - mean * gamma * inv_std).reshape(1, cout, 1).astype(jnp.float32)

    # ---------------- pass 2: fused per-channel affine + ReLU (big blocks) --
    tile2_cap = max(128, (2 * 1024 * 1024 // (cout * 4)) // 128 * 128)
    tile2 = min(_round_up(t_out, 128), tile2_cap)
    num_tiles2 = _cdiv(t_out, tile2)

    def norm_relu_kernel(conv_ref, scale_ref, shift_ref, out_ref):
        y = conv_ref[...] * scale_ref[...] + shift_ref[...]
        out_ref[...] = jnp.maximum(y, 0.0)

    out = pl.pallas_call(
        norm_relu_kernel,
        grid=(n, num_tiles2),
        in_specs=[
            pl.BlockSpec((1, cout, tile2), lambda b, i: (b, 0, i)),
            pl.BlockSpec((1, cout, 1), lambda b, i: (0, 0, 0)),
            pl.BlockSpec((1, cout, 1), lambda b, i: (0, 0, 0)),
        ],
        out_specs=pl.BlockSpec((1, cout, tile2), lambda b, i: (b, 0, i)),
        out_shape=jax.ShapeDtypeStruct((n, cout, t_out), jnp.float32),
        compiler_params=cparams,
        cost_estimate=pl.CostEstimate(
            flops=3 * n * cout * t_out,
            transcendentals=0,
            bytes_accessed=4 * (2 * n * cout * t_out + 2 * cout)),
    )(conv_out, scale, shift)

    # layout already (N, Cout, T_out); no tail slice needed
    return out


def _reference(x, weight, bias, gamma, beta, eps=1e-3):
    """Pure-JAX reference (Conv3d + training-mode BatchNorm1d + ReLU)."""
    n, cin, t, h, w = x.shape
    cout, _, kt, kh, kw = weight.shape
    t_out = t - kt + 1
    idx = jnp.arange(t_out)[:, None] + jnp.arange(kt)[None, :]   # (T_out, KT)
    xw = x[:, :, idx, :, :]                                      # (N, Cin, T_out, KT, H, W)
    conv = jnp.einsum('nctkhw,ockhw->not', xw, weight) + bias[None, :, None]
    mean = conv.mean(axis=(0, 2), keepdims=True)
    var = ((conv - mean) ** 2).mean(axis=(0, 2), keepdims=True)  # biased
    y = (conv - mean) / jnp.sqrt(var + eps)
    y = y * gamma[None, :, None] + beta[None, :, None]
    return jnp.maximum(y, 0.0)


if __name__ == "__main__":
    # Small shapes consistent with the module: full 3x3 spatial kernel,
    # temporal axis slides.
    N, Cin, Cout = 2, 4, 8
    T, H, W = 16, 3, 3
    KT, KH, KW = 3, 3, 3

    key = jax.random.PRNGKey(0)
    kx, kw_, kb, kg, kbe = jax.random.split(key, 5)

    x = jax.random.normal(kx, (N, Cin, T, H, W), dtype=jnp.float32)
    weight = 0.1 * jax.random.normal(kw_, (Cout, Cin, KT, KH, KW), dtype=jnp.float32)
    bias = 0.1 * jax.random.normal(kb, (Cout,), dtype=jnp.float32)
    gamma = 1.0 + 0.1 * jax.random.normal(kg, (Cout,), dtype=jnp.float32)
    beta = 0.1 * jax.random.normal(kbe, (Cout,), dtype=jnp.float32)

    out = spatial_aggregation_block(x, weight, bias, gamma, beta)
    out = jax.block_until_ready(out)

    ref = _reference(x, weight, bias, gamma, beta)
    assert out.shape == (N, Cout, T - KT + 1), out.shape
    err = float(jnp.max(jnp.abs(out - ref)))
    assert err < 2e-4, f"max abs err {err}"

    print("KERNEL_OK")
</pallas_src>

<mosaic_0001>
module attributes {stable_mosaic.version = 11 : i64} {
  func.func @conv_stats_kernel(%arg0: i32, %arg1: i32, %arg2: memref<1x108x128xf32, #tpu.memory_space<vmem>>, %arg3: memref<8x108xf32, #tpu.memory_space<vmem>>, %arg4: memref<1x8x128xf32, #tpu.memory_space<vmem>>, %arg5: memref<1x1x8x1xf32, #tpu.memory_space<vmem>>, %arg6: memref<1x1x8x1xf32, #tpu.memory_space<vmem>>) attributes {dimension_semantics = [#tpu.dimension_semantics<parallel>, #tpu.dimension_semantics<parallel>], iteration_bounds = array<i64: 2, 1>, scalar_prefetch = 0 : i64, scratch_operands = 0 : i64, tpu.core_type = #tpu.core_type<tc>, window_params = [{transform_indices = @transform_0, window_bounds = array<i64: 1, 108, 128>}, {pipeline_mode = #tpu.pipeline_mode<synchronous>, transform_indices = @transform_1, window_bounds = array<i64: 8, 108>}, {transform_indices = @transform_2, window_bounds = array<i64: 1, 8, 128>}, {transform_indices = @transform_3, window_bounds = array<i64: 1, 1, 8, 1>}, {transform_indices = @transform_4, window_bounds = array<i64: 1, 1, 8, 1>}]} {
    %c0 = arith.constant 0 : index
    %c0_0 = arith.constant 0 : index
    %0 = vector.load %arg3[%c0, %c0_0] : memref<8x108xf32, #tpu.memory_space<vmem>>, vector<8x108xf32>
    %c0_1 = arith.constant 0 : index
    %c0_2 = arith.constant 0 : index
    %c0_3 = arith.constant 0 : index
    %1 = vector.load %arg2[%c0_1, %c0_2, %c0_3] : memref<1x108x128xf32, #tpu.memory_space<vmem>>, vector<1x108x128xf32>
    %2 = vector.shape_cast %1 : vector<1x108x128xf32> to vector<108x128xf32>
    %cst = arith.constant dense<0.000000e+00> : vector<8x128xf32>
    %3 = tpu.matmul %0, %2, %cst {dimension_numbers = #tpu.dot_dimension_numbers<[1], [0], [0], [1], [0, 0, 1, 1], [], []>} : vector<8x108xf32>, vector<108x128xf32>, vector<8x128xf32> -> vector<8x128xf32>
    %c0_4 = arith.constant 0 : index
    %c0_5 = arith.constant 0 : index
    %c0_6 = arith.constant 0 : index
    %4 = vector.load %arg4[%c0_4, %c0_5, %c0_6] : memref<1x8x128xf32, #tpu.memory_space<vmem>>, vector<1x8x128xf32>
    %5 = vector.shape_cast %4 : vector<1x8x128xf32> to vector<8x128xf32>
    %6 = vector.shape_cast %3 : vector<8x128xf32> to vector<1x8x128xf32>
    tpu.vector_store %arg4[%c0_4, %c0_5, %c0_6], %6 {strides = array<i32>} : memref<1x8x128xf32, #tpu.memory_space<vmem>>, vector<1x8x128xf32>,
    %cst_7 = arith.constant dense<0.000000e+00> : vector<8xf32>
    %7 = vector.multi_reduction <add>, %3, %cst_7 [1] : vector<8x128xf32> to vector<8xf32>
    %8 = vector.shape_cast %7 : vector<8xf32> to vector<8x1xf32>
    %c0_8 = arith.constant 0 : index
    %c0_9 = arith.constant 0 : index
    %c0_10 = arith.constant 0 : index
    %c0_11 = arith.constant 0 : index
    %9 = vector.load %arg5[%c0_8, %c0_9, %c0_10, %c0_11] : memref<1x1x8x1xf32, #tpu.memory_space<vmem>>, vector<1x1x8x1xf32>
    %10 = vector.shape_cast %9 : vector<1x1x8x1xf32> to vector<8x1xf32>
    %11 = vector.shape_cast %8 : vector<8x1xf32> to vector<1x1x8x1xf32>
    tpu.vector_store %arg5[%c0_8, %c0_9, %c0_10, %c0_11], %11 {strides = array<i32>} : memref<1x1x8x1xf32, #tpu.memory_space<vmem>>, vector<1x1x8x1xf32>,
    %12 = arith.mulf %3, %3 : vector<8x128xf32>
    %cst_12 = arith.constant dense<0.000000e+00> : vector<8xf32>
    %13 = vector.multi_reduction <add>, %12, %cst_12 [1] : vector<8x128xf32> to vector<8xf32>
    %14 = vector.shape_cast %13 : vector<8xf32> to vector<8x1xf32>
    %c0_13 = arith.constant 0 : index
    %c0_14 = arith.constant 0 : index
    %c0_15 = arith.constant 0 : index
    %c0_16 = arith.constant 0 : index
    %15 = vector.load %arg6[%c0_13, %c0_14, %c0_15, %c0_16] : memref<1x1x8x1xf32, #tpu.memory_space<vmem>>, vector<1x1x8x1xf32>
    %16 = vector.shape_cast %15 : vector<1x1x8x1xf32> to vector<8x1xf32>
    %17 = vector.shape_cast %14 : vector<8x1xf32> to vector<1x1x8x1xf32>
    tpu.vector_store %arg6[%c0_13, %c0_14, %c0_15, %c0_16], %17 {strides = array<i32>} : memref<1x1x8x1xf32, #tpu.memory_space<vmem>>, vector<1x1x8x1xf32>,
    return
  }
  func.func @transform_0(%arg0: i32, %arg1: i32) -> (i32, i32, i32) {
    %c0_i32 = arith.constant 0 : i32
    %c0_i32_0 = arith.constant 0 : i32
    return %arg0, %c0_i32, %arg1 : i32, i32, i32
  }
  func.func @transform_1(%arg0: i32, %arg1: i32) -> (i32, i32) {
    %c0_i32 = arith.constant 0 : i32
    %c0_i32_0 = arith.constant 0 : i32
    %c0_i32_1 = arith.constant 0 : i32
    return %c0_i32, %c0_i32_0 : i32, i32
  }
  func.func @transform_2(%arg0: i32, %arg1: i32) -> (i32, i32, i32) {
    %c0_i32 = arith.constant 0 : i32
    %c0_i32_0 = arith.constant 0 : i32
    return %arg0, %c0_i32, %arg1 : i32, i32, i32
  }
  func.func @transform_3(%arg0: i32, %arg1: i32) -> (i32, i32, i32, i32) {
    %c0_i32 = arith.constant 0 : i32
    %c0_i32_0 = arith.constant 0 : i32
    %c0_i32_1 = arith.constant 0 : i32
    return %arg0, %arg1, %c0_i32, %c0_i32_0 : i32, i32, i32, i32
  }
  func.func @transform_4(%arg0: i32, %arg1: i32) -> (i32, i32, i32, i32) {
    %c0_i32 = arith.constant 0 : i32
    %c0_i32_0 = arith.constant 0 : i32
    %c0_i32_1 = arith.constant 0 : i32
    return %arg0, %arg1, %c0_i32, %c0_i32_0 : i32, i32, i32, i32
  }
}

</mosaic_0001>

<llo_original>
// kernel: tpu_custom_call.1
$region0: #{tpu_custom_call.1}
  #allocation0 [shape = 'u32[]', space=smem, size = 0x4, offset = 0x4, fixed_abs, tag = 'smem constant byte address 0x4 - core index']
  #allocation1 [shape = 'u32[72,128]{1,0:T(1,128)}', space=vmem, size = 0x9000, scoped, tag = 'internal scratch']
  %s0 = inlined_call_operand.vmem [shape: f32[2,108,128], index: 0, kind: input, shape index: {}]
  %s1 = inlined_call_operand.vmem [shape: f32[8,108], index: 1, kind: input, shape index: {}]
  %s2 = inlined_call_operand.hbm [shape: f32[2,8,14], index: 2, kind: output, shape index: {0}]
  %s3 = inlined_call_operand.vmem [shape: f32[2,1,8,1], index: 3, kind: output, shape index: {1}]
  %s4 = inlined_call_operand.vmem [shape: f32[2,1,8,1], index: 4, kind: output, shape index: {2}]
  %5 = xla_tuple %s2, %s3, %s4
  %s6 = sld [smem:[#allocation0]]
  $region57: #{tpu_custom_call.1} parent=0
    _
  %s8 = ssub.s32 1, %s6
  %s9 = scalar_select 0, %s8, %s6
  $region1: #{tpu_custom_call.1} parent=0
    #allocation2 [shape = 'u8[8192]{0}', space=vmem, size = 0x2000, scoped, tag = 'output window, operand 0']
    #allocation3 [shape = 's32[2]{0}', space=sflag, size = 0x8, scoped, tag = 'scoped memory for tpu_custom_call.1']
    %10 = vsyncpa [#allocation3], 0
    %s11 = scalar_lea.sflag [#allocation3], 1
    %12 = vsyncpa %s11, 0
    loop: start=0, step=1, limit=4
    $region2: #{tpu_custom_call.1} parent=1 // loop_pre_header
      _
    $region3: #{tpu_custom_call.1} parent=1 // loop_header
      %s14 = sphi 0, %s18
      %p15 = scmp.ge.s32.totalorder %s14, 4
      %s21 = sphi 0, %s33
      %s22 = sphi 0, %s29
      %s23 = sphi 0, %s21
      %s24 = sphi 0, %s22
      %s25 = sphi 0, %s23
      %s26 = sphi 0, %s24
      %s38 = sphi 0, %s40
      %s41 = sphi 0, %s38
      %s42 = sphi 0, %s41
      %s58 = sphi 0, %s42
      %s62 = sphi 0, %s62
      %s64 = sphi 0, %s62
      %s65 = sphi 0, %s64
      %s79 = sphi 0, %s65
      %s87 = sphi 0, %s89
      %s90 = sphi 0, %s87
      %s91 = sphi 0, %s90
      %s107 = sphi 0, %s91
      %s115 = sphi 0, %s117
      %s118 = sphi 0, %s115
      %s119 = sphi 0, %s118
      %s135 = sphi 0, %s119
      %s143 = sphi 0, %s145
      %s146 = sphi 0, %s143
      %s147 = sphi 0, %s146
      %s163 = sphi 0, %s147
    $region4: #{tpu_custom_call.1} parent=1 // loop_header_branch
      %17 = sbr.rel (%p15) target = $region8
    $region5: #{tpu_custom_call.1} parent=1 // loop_body
      %s19 = ssub.s32 %s14, 1
      %s20 = ssub.s32 %s14, 2
      %s27 = sadd.s32 1, %s22
      %p28 = scmp.ge.s32.totalorder %s27, 1
      %s29 = scalar_select %p28, 0, %s27
      %s30 = sadd.s32 1, %s21
      %s31 = scalar_select %p28, %s30, %s21
      %p32 = scmp.ge.s32.totalorder %s31, 2
      %s33 = scalar_select %p32, 0, %s31
      %s34 = ssub.s32 %s21, %s33
      %s35 = ssub.s32 %s22, %s29
      %s36 = sor.u32 %s34, %s35
      %p37 = scmp.eq.s32.totalorder %s36, 0
      %s39 = sadd.s32 %s38, 1
      %s40 = scalar_select %p37, %s38, %s39
      %p43 = pneg %p37
      %p44 = scmp.eq.s32.totalorder %s14, 1
      %p45 = por %p43, %p44
      %p46 = scmp.ne.s32.totalorder %s38, %s41
      %p47 = scmp.eq.s32.totalorder %s14, 0
      %p48 = por %p46, %p47
      %p49 = scmp.ne.s32.totalorder %s38, %s41
      %p50 = scmp.eq.s32.totalorder %s19, 1
      %p51 = por %p49, %p50
      %p52 = scmp.ne.s32.totalorder %s41, %s42
      %p53 = scmp.eq.s32.totalorder %s19, 0
      %p54 = por %p52, %p53
      %p55 = scmp.ne.s32.totalorder %s41, %s42
      %p56 = scmp.eq.s32.totalorder %s20, 1
      %p57 = por %p55, %p56
      %p59 = scmp.ne.s32.totalorder %s42, %s58
      %p60 = scmp.eq.s32.totalorder %s20, 0
      %p61 = por %p59, %p60
      %s63 = sadd.s32 %s62, 1
      %p66 = scmp.eq.s32.totalorder %s14, 1
      %p67 = scmp.ne.s32.totalorder %s62, %s64
      %p68 = scmp.eq.s32.totalorder %s14, 0
      %p69 = por %p67, %p68
      %p70 = scmp.ne.s32.totalorder %s62, %s64
      %p71 = scmp.eq.s32.totalorder %s19, 1
      %p72 = por %p70, %p71
      %p73 = scmp.ne.s32.totalorder %s64, %s65
      %p74 = scmp.eq.s32.totalorder %s19, 0
      %p75 = por %p73, %p74
      %p76 = scmp.ne.s32.totalorder %s64, %s65
      %p77 = scmp.eq.s32.totalorder %s20, 1
      %p78 = por %p76, %p77
      %p80 = scmp.ne.s32.totalorder %s65, %s79
      %p81 = scmp.eq.s32.totalorder %s20, 0
      %p82 = por %p80, %p81
      %s83 = ssub.s32 %s21, %s33
      %s84 = ssub.s32 %s22, %s29
      %s85 = sor.u32 %s83, %s84
      %p86 = scmp.eq.s32.totalorder %s85, 0
      %s88 = sadd.s32 %s87, 1
      %s89 = scalar_select %p86, %s87, %s88
      %p92 = pneg %p86
      %p93 = scmp.eq.s32.totalorder %s14, 1
      %p94 = por %p92, %p93
      %p95 = scmp.ne.s32.totalorder %s87, %s90
      %p96 = scmp.eq.s32.totalorder %s14, 0
      %p97 = por %p95, %p96
      %p98 = scmp.ne.s32.totalorder %s87, %s90
      %p99 = scmp.eq.s32.totalorder %s19, 1
      %p100 = por %p98, %p99
      %p101 = scmp.ne.s32.totalorder %s90, %s91
      %p102 = scmp.eq.s32.totalorder %s19, 0
      %p103 = por %p101, %p102
      %p104 = scmp.ne.s32.totalorder %s90, %s91
      %p105 = scmp.eq.s32.totalorder %s20, 1
      %p106 = por %p104, %p105
      %p108 = scmp.ne.s32.totalorder %s91, %s107
      %p109 = scmp.eq.s32.totalorder %s20, 0
      %p110 = por %p108, %p109
      %s111 = ssub.s32 %s21, %s33
      %s112 = ssub.s32 %s22, %s29
      %s113 = sor.u32 %s111, %s112
      %p114 = scmp.eq.s32.totalorder %s113, 0
      %s116 = sadd.s32 %s115, 1
      %s117 = scalar_select %p114, %s115, %s116
      %p120 = pneg %p114
      %p121 = scmp.eq.s32.totalorder %s14, 1
      %p122 = por %p120, %p121
      %p123 = scmp.ne.s32.totalorder %s115, %s118
      %p124 = scmp.eq.s32.totalorder %s14, 0
      %p125 = por %p123, %p124
      %p126 = scmp.ne.s32.totalorder %s115, %s118
      %p127 = scmp.eq.s32.totalorder %s19, 1
      %p128 = por %p126, %p127
      %p129 = scmp.ne.s32.totalorder %s118, %s119
      %p130 = scmp.eq.s32.totalorder %s19, 0
      %p131 = por %p129, %p130
      %p132 = scmp.ne.s32.totalorder %s118, %s119
      %p133 = scmp.eq.s32.totalorder %s20, 1
      %p134 = por %p132, %p133
      %p136 = scmp.ne.s32.totalorder %s119, %s135
      %p137 = scmp.eq.s32.totalorder %s20, 0
      %p138 = por %p136, %p137
      %s139 = ssub.s32 %s21, %s33
      %s140 = ssub.s32 %s22, %s29
      %s141 = sor.u32 %s139, %s140
      %p142 = scmp.eq.s32.totalorder %s141, 0
      %s144 = sadd.s32 %s143, 1
      %s145 = scalar_select %p142, %s143, %s144
      %p148 = pneg %p142
      %p149 = scmp.eq.s32.totalorder %s14, 1
      %p150 = por %p148, %p149
      %p151 = scmp.ne.s32.totalorder %s143, %s146
      %p152 = scmp.eq.s32.totalorder %s14, 0
      %p153 = por %p151, %p152
      %p154 = scmp.ne.s32.totalorder %s143, %s146
      %p155 = scmp.eq.s32.totalorder %s19, 1
      %p156 = por %p154, %p155
      %p157 = scmp.ne.s32.totalorder %s146, %s147
      %p158 = scmp.eq.s32.totalorder %s19, 0
      %p159 = por %p157, %p158
      %p160 = scmp.ne.s32.totalorder %s146, %s147
      %p161 = scmp.eq.s32.totalorder %s20, 1
      %p162 = por %p160, %p161
      %p164 = scmp.ne.s32.totalorder %s147, %s163
      %p165 = scmp.eq.s32.totalorder %s20, 0
      %p166 = por %p164, %p165
      %p167 = scmp.le.s32.totalorder 1, %s14
      %p168 = scmp.lt.s32.totalorder %s14, 3
      %p169 = pnand %p167, %p168
      %p170 = pneg %p169
      // Predicated region
      $region9: #{tpu_custom_call.1} parent=5 // pred_check
        _
      $region10: #{tpu_custom_call.1} parent=5 // pred_check_branch
        %172 = sbr.rel (%p169) target = $region12
      $region11: #{tpu_custom_call.1} parent=5 // pred_region
        %s173 = ssub.s32 %s14, 1
        // Predicated region
        $region13: #{tpu_custom_call.1} parent=11 // pred_check
          %p174 = pneg %p75
        $region14: #{tpu_custom_call.1} parent=11 // pred_check_branch
          %176 = sbr.rel (%p174) target = $region16
        $region15: #{tpu_custom_call.1} parent=11 // pred_region
          _
        $region16: #{tpu_custom_call.1} parent=11 // pred_fallthru
          _
      $region12: #{tpu_custom_call.1} parent=5 // pred_fallthru
        _
      %p177 = scmp.lt.s32.totalorder %s14, 2
      // Predicated region
      $region17: #{tpu_custom_call.1} parent=5 // pred_check
        %p178 = pneg %p177
      $region18: #{tpu_custom_call.1} parent=5 // pred_check_branch
        %180 = sbr.rel (%p178) target = $region20
      $region19: #{tpu_custom_call.1} parent=5 // pred_region
        // Predicated region
        $region21: #{tpu_custom_call.1} parent=19 // pred_check
          %p181 = pneg %p48
        $region22: #{tpu_custom_call.1} parent=19 // pred_check_branch
          %183 = sbr.rel (%p181) target = $region24
        $region23: #{tpu_custom_call.1} parent=19 // pred_region
          %p184 = scmp.lt.s32.totalorder %s21, 1
          %s185 = scalar_select %p184, %s21, 1
          %p186 = scmp.lt.s32.totalorder %s22, 0
          %s187 = scalar_select %p186, %s22, 0
          %s188 = smul.addr %s185, 14
          %s189 = sadd.s32 %s187, %s188
          %s190 = smul.addr %s189, 8
          %s191 = scalar_lea.vmem %s0, %s190
        $region24: #{tpu_custom_call.1} parent=19 // pred_fallthru
          _
      $region20: #{tpu_custom_call.1} parent=5 // pred_fallthru
        _
      %p192 = scmp.le.s32.totalorder 1, %s14
      %p193 = scmp.lt.s32.totalorder %s14, 3
      %p194 = pnand %p192, %p193
      %p195 = pneg %p194
      // Predicated region
      $region25: #{tpu_custom_call.1} parent=5 // pred_check
        _
      $region26: #{tpu_custom_call.1} parent=5 // pred_check_branch
        %197 = sbr.rel (%p194) target = $region28
      $region27: #{tpu_custom_call.1} parent=5 // pred_region
        %s198 = ssub.s32 %s14, 1
        %p199 = scmp.lt.s32.totalorder %s23, 1
        %s200 = scalar_select %p199, %s23, 1
        %p201 = scmp.lt.s32.totalorder %s24, 0
        %s202 = scalar_select %p201, %s24, 0
        %s203 = smul.addr %s200, 14
        %s204 = sadd.s32 %s202, %s203
        %s205 = smul.addr %s204, 8
        %s206 = scalar_lea.vmem %s0, %s205
        %p207 = pneg %p54
        %p208 = pneg %p51
        %p209 = pneg %p75
        %p210 = pneg %p72
        %p211 = pneg %p103
        %p212 = pneg %p100
        %s213 = sand.u32 %s90, 1
        %s214 = scalar_lea.sflag [#allocation3], %s213
        %s215 = sand.u32 %s90, 1
        %s216 = smul.addr %s215, 8
        %s217 = scalar_lea.vmem [#allocation2], %s216
        %p218 = pneg %p131
        %p219 = pneg %p128
        %p220 = scmp.lt.s32.totalorder %s23, 1
        %s221 = scalar_select %p220, %s23, 1
        %p222 = scmp.lt.s32.totalorder %s24, 0
        %s223 = scalar_select %p222, %s24, 0
        %s224 = sadd.s32 %s223, %s221
        %s225 = smul.addr %s224, 8
        %s226 = scalar_lea.vmem %s3, %s225
        %p227 = pneg %p159
        %p228 = pneg %p156
        %p229 = scmp.lt.s32.totalorder %s23, 1
        %s230 = scalar_select %p229, %s23, 1
        %p231 = scmp.lt.s32.totalorder %s24, 0
        %s232 = scalar_select %p231, %s24, 0
        %s233 = sadd.s32 %s232, %s230
        %s234 = smul.addr %s233, 8
        %s235 = scalar_lea.vmem %s4, %s234
        %p236 = scmp.lt.s32.totalorder %s23, 1
        %s237 = scalar_select %p236, %s23, 1
        %p238 = scmp.lt.s32.totalorder %s24, 0
        %s239 = scalar_select %p238, %s24, 0
        %s240 = smul.addr %s237, 14
        %s241 = sadd.s32 %s239, %s240
        %s242 = smul.addr %s241, 8
        %s243 = scalar_lea.vmem %s0, %s242
        %p244 = scmp.lt.s32.totalorder %s23, 1
        %s245 = scalar_select %p244, %s23, 1
        %p246 = scmp.lt.s32.totalorder %s24, 0
        %s247 = scalar_select %p246, %s24, 0
        %s248 = sadd.s32 %s247, %s245
        %s249 = smul.addr %s248, 8
        %s250 = scalar_lea.vmem %s3, %s249
        %p251 = scmp.lt.s32.totalorder %s23, 1
        %s252 = scalar_select %p251, %s23, 1
        %p253 = scmp.lt.s32.totalorder %s24, 0
        %s254 = scalar_select %p253, %s24, 0
        %s255 = sadd.s32 %s254, %s252
        %s256 = smul.addr %s255, 8
        %s257 = scalar_lea.vmem %s4, %s256
        %v258 = vld [vmem:[%s1] sm:$0xff]
        %v259 = vld [vmem:[%s243] sm:$0xff]
        %v260 = vld [vmem:[%s243 + $0x8] sm:$0xff]
        %v261 = vld [vmem:[%s243 + $0x10] sm:$0xff]
        %v262 = vld [vmem:[%s243 + $0x18] sm:$0xff]
        %v263 = vld [vmem:[%s243 + $0x20] sm:$0xff]
        %v264 = vld [vmem:[%s243 + $0x28] sm:$0xff]
        %v265 = vld [vmem:[%s243 + $0x30] sm:$0xff]
        %v266 = vld [vmem:[%s243 + $0x38] sm:$0xff]
        %v267 = vld [vmem:[%s243 + $0x40] sm:$0xff]
        %v268 = vld [vmem:[%s243 + $0x48] sm:$0xff]
        %v269 = vld [vmem:[%s243 + $0x50] sm:$0xff]
        %v270 = vld [vmem:[%s243 + $0x58] sm:$0xff]
        %v271 = vld [vmem:[%s243 + $0x60] sm:$0xff]
        %v272 = vld [vmem:[%s243 + $0x68] sm:$0xf]
        %vm273 = vcmask 883712
        %v275 = vsel %vm273, %v258, 0
        %vm277 = vcmask 1043456
        %v279 = vsel %vm277, %v272, 0
        %281 = vmatpush.msra.mxu0 0.0
        %282 = vmatpush.msra.mxu0 0.0
        %283 = vmatpush.msra.mxu0 %v279
        %284 = vmatpush.msra.mxu0 %v271
        %285 = vmatpush.msra.mxu0 %v270
        %286 = vmatpush.msra.mxu0 %v269
        %287 = vmatpush.msra.mxu0 %v268
        %288 = vmatpush.msra.mxu0 %v267
        %289 = vmatpush.msra.mxu0 %v266
        %290 = vmatpush.msra.mxu0 %v265
        %291 = vmatpush.msra.mxu0 %v264
        %292 = vmatpush.msra.mxu0 %v263
        %293 = vmatpush.msra.mxu0 %v262
        %294 = vmatpush.msra.mxu0 %v261
        %295 = vmatpush.msra.mxu0 %v260
        %296 = vmatpush.msra.mxu0 %v259
        %297 = vmatmul.f32.gmra.mxu0 %v275
        %v298 = vpop.f32.mrf.mxu0
        %v299 = vadd.f32 0.0, %v298
        %300 = vdwg.mxu0
        %301 = vst [vmem:[%s217] sm:$0xff] %v299
        %302 = vadd.xlane.f32.xlu0 %v299
        %v303 = vpop.xlane.xlu0 %302
        %vm304 = vcmask 7168
        %305 = vst.msk [vmem:[%s250] sm:$0xff] %vm304, %v303
        %v306 = vmul.f32 %v299, %v299
        %307 = vadd.xlane.f32.xlu0 %v306
        %v308 = vpop.xlane.xlu0 %307
        %309 = vst.msk [vmem:[%s257] sm:$0xff] %vm304, %v308
        %s310 = sand.u32 %s90, 1
        %s311 = scalar_lea.sflag [#allocation3], %s310
        %s312 = sand.u32 %s90, 1
        %s313 = smul.addr %s312, 8
        %s314 = scalar_lea.vmem [#allocation2], %s313
        %p315 = scmp.lt.s32.totalorder %s23, 1
        %s316 = scalar_select %p315, %s23, 1
        %p317 = scmp.lt.s32.totalorder %s24, 0
        %s318 = scalar_select %p317, %s24, 0
        %s319 = sadd.s32 %s318, %s316
        %s320 = smul.addr %s319, 8
        %s321 = scalar_lea.vmem %s3, %s320
        %p322 = scmp.lt.s32.totalorder %s23, 1
        %s323 = scalar_select %p322, %s23, 1
        %p324 = scmp.lt.s32.totalorder %s24, 0
        %s325 = scalar_select %p324, %s24, 0
        %s326 = sadd.s32 %s325, %s323
        %s327 = smul.addr %s326, 8
        %s328 = scalar_lea.vmem %s4, %s327
        // Predicated region
        $region29: #{tpu_custom_call.1} parent=27 // pred_check
          %p329 = pneg %p100
        $region30: #{tpu_custom_call.1} parent=27 // pred_check_branch
          %331 = sbr.rel (%p329) target = $region32
        $region31: #{tpu_custom_call.1} parent=27 // pred_region
          %333 = vsyncadd %s311, 0
          %s334 = sadd.s32 %s24, %s23
          %s335 = smul.addr %s334, 8
          %s336 = scalar_lea.hbm %s2, %s335
          %s338 = sshll.u32 %s314, 4
          %s339 = int_to_ptr.vmem [resolvable:$true] %s338
          %s340 = sshll.u32 %s336, 4
          %s341 = int_to_ptr.hbm [resolvable:$true] %s340
          %343 = dma.vmem_to_hbm [thread:$0]  %s339, 128, %s341, %s311
        $region32: #{tpu_custom_call.1} parent=27 // pred_fallthru
          _
        // Predicated region
        $region33: #{tpu_custom_call.1} parent=27 // pred_check
          %p344 = pneg %p128
        $region34: #{tpu_custom_call.1} parent=27 // pred_check_branch
          %346 = sbr.rel (%p344) target = $region36
        $region35: #{tpu_custom_call.1} parent=27 // pred_region
          _
        $region36: #{tpu_custom_call.1} parent=27 // pred_fallthru
          _
        // Predicated region
        $region37: #{tpu_custom_call.1} parent=27 // pred_check
          %p347 = pneg %p156
        $region38: #{tpu_custom_call.1} parent=27 // pred_check_branch
          %349 = sbr.rel (%p347) target = $region40
        $region39: #{tpu_custom_call.1} parent=27 // pred_region
          _
        $region40: #{tpu_custom_call.1} parent=27 // pred_fallthru
          _
      $region28: #{tpu_custom_call.1} parent=5 // pred_fallthru
        _
      %p350 = scmp.le.s32.totalorder 2, %s14
      // Predicated region
      $region41: #{tpu_custom_call.1} parent=5 // pred_check
        %p351 = pneg %p350
      $region42: #{tpu_custom_call.1} parent=5 // pred_check_branch
        %353 = sbr.rel (%p351) target = $region44
      $region43: #{tpu_custom_call.1} parent=5 // pred_region
        %s354 = ssub.s32 %s14, 2
        // Predicated region
        $region45: #{tpu_custom_call.1} parent=43 // pred_check
          %p355 = pneg %p106
        $region46: #{tpu_custom_call.1} parent=43 // pred_check_branch
          %357 = sbr.rel (%p355) target = $region48
        $region47: #{tpu_custom_call.1} parent=43 // pred_region
          %s358 = sand.u32 %s91, 1
          %s359 = scalar_lea.sflag [#allocation3], %s358
          %s360 = sand.u32 %s91, 1
          %s361 = smul.addr %s360, 8
          %s362 = scalar_lea.vmem [#allocation2], %s361
          %364 = dma.done %s359, 128
        $region48: #{tpu_custom_call.1} parent=43 // pred_fallthru
          _
        // Predicated region
        $region49: #{tpu_custom_call.1} parent=43 // pred_check
          %p365 = pneg %p134
        $region50: #{tpu_custom_call.1} parent=43 // pred_check_branch
          %367 = sbr.rel (%p365) target = $region52
        $region51: #{tpu_custom_call.1} parent=43 // pred_region
          %p368 = scmp.lt.s32.totalorder %s25, 1
          %s369 = scalar_select %p368, %s25, 1
          %p370 = scmp.lt.s32.totalorder %s26, 0
          %s371 = scalar_select %p370, %s26, 0
          %s372 = sadd.s32 %s371, %s369
          %s373 = smul.addr %s372, 8
          %s374 = scalar_lea.vmem %s3, %s373
        $region52: #{tpu_custom_call.1} parent=43 // pred_fallthru
          _
        // Predicated region
        $region53: #{tpu_custom_call.1} parent=43 // pred_check
          %p375 = pneg %p162
        $region54: #{tpu_custom_call.1} parent=43 // pred_check_branch
          %377 = sbr.rel (%p375) target = $region56
        $region55: #{tpu_custom_call.1} parent=43 // pred_region
          %p378 = scmp.lt.s32.totalorder %s25, 1
          %s379 = scalar_select %p378, %s25, 1
          %p380 = scmp.lt.s32.totalorder %s26, 0
          %s381 = scalar_select %p380, %s26, 0
          %s382 = sadd.s32 %s381, %s379
          %s383 = smul.addr %s382, 8
          %s384 = scalar_lea.vmem %s4, %s383
        $region56: #{tpu_custom_call.1} parent=43 // pred_fallthru
          _
      $region44: #{tpu_custom_call.1} parent=5 // pred_fallthru
        _
    $region6: #{tpu_custom_call.1} parent=1 // loop_footer
      %s18 = sadd.s32 1, %s14
    $region7: #{tpu_custom_call.1} parent=1 // loop_footer_branch
      %13 = sbr.rel target = $region3
    $region8: #{tpu_custom_call.1} parent=1 // loop_exit
      _
    %385 = vsyncpa [#allocation3], 1
    %s386 = scalar_lea.sflag [#allocation3], 1
    %387 = vsyncpa %s386, 1

</llo_original>
